<compile_context>
chip_gen: v5e
topology: v5e:2x2
jax: 0.10.0
libtpu: 0.0.40
codegen_flags: <defaults>
</compile_context>

<pallas_src>
import functools

import jax
import jax.numpy as jnp
import numpy as np
from jax.experimental import pallas as pl
from jax.experimental.pallas import tpu as pltpu


def _snet_kernel(ms_t_ref, ws_ref, mask_ref, gru_ref, atte_ref, *, approx_recip):
    N = gru_ref.shape[0]           # B_TILE * S * L words in this step
    NS = mask_ref.shape[0]         # B_TILE * S sentences in this step

    x = gru_ref[...]                                   # (N, R)  compute dtype
    mask_b = mask_ref[...] != 0                        # (NS, N) loop-invariant, resident

    # Fused word -> attention projection on the MXU; f32 accumulation.
    h = jnp.tanh(jnp.dot(x, ms_t_ref[...],
                         preferred_element_type=jnp.float32))        # (N, A) f32

    # Lane-dense per-word scores: (1, A) . (N, A)^T -> (1, N).
    scores = jax.lax.dot_general(ws_ref[...], h, (((1,), (1,)), ((), ())),
                                 preferred_element_type=jnp.float32)  # (1, N) f32

    # Per-sentence max (lane reduce) scattered back to the word axis
    # (sublane reduce).  exp then runs ONCE on the lane-dense row:
    # N EUP exponentials instead of NS*N.
    neg = jnp.float32(-1e30)
    sb = jnp.where(mask_b, jnp.broadcast_to(scores, (NS, N)), neg)    # (NS, N)
    m = jnp.max(sb, axis=-1, keepdims=True)                           # (NS, 1)
    m_row = jnp.max(jnp.where(mask_b, jnp.broadcast_to(m, (NS, N)), neg),
                    axis=0, keepdims=True)                            # (1, N)
    e_row = jnp.exp(scores - m_row)                                   # (1, N)

    # Per-sentence softmax weights.  The outer where re-masks cross-sentence
    # entries (and any -1e30 underflow), so no NaN/Inf can leak -- keep it.
    p = jnp.where(mask_b, jnp.broadcast_to(e_row, (NS, N)), 0.0)      # (NS, N) f32
    denom = jnp.sum(p, axis=-1, keepdims=True)                        # (NS, 1) >= 1
    if approx_recip:
        soft = p * pl.reciprocal(denom, approx=True)                  # EUP slot, ~free
    else:
        soft = p / denom                                              # exact (verification)

    # Sentence pooling on the MXU in the compute dtype (no f32 upcast of x);
    # accumulation stays f32 via preferred_element_type.
    atte_ref[...] = jnp.dot(soft.astype(x.dtype), x,
                            preferred_element_type=jnp.float32)       # (NS, R)


def snet_forward(Ms, Ws, gru_repr, word_soft, sent_length, *,
                 compute_dtype=jnp.bfloat16, batch_tile=8,
                 approx_reciprocal=True, core_parallel=False):
    """Pallas SNet forward.  Returns (self_atte (B,S,R) f32, sentiment (B,R) f32).

    core_parallel=True shards the batch grid axis across TensorCores (v7x).
    """
    B, W, R = gru_repr.shape
    L = int(sent_length)
    assert W % L == 0, "sent_length must divide the word axis"
    S = W // L
    A = Ms.shape[0]
    assert Ms.shape == (A, R) and Ws.shape == (1, A)
    assert word_soft.size == B * W

    # ---- choose how many batch rows to fuse per grid step -------------------
    bt = max(1, min(int(batch_tile), B))
    # keep the second-minor dims of tiled blocks multiples of 8 (sublane rule);
    # if bt reaches B the block spans the whole array and is always legal.
    while bt < B and ((bt * S) % 8 != 0 or (bt * S * L) % 8 != 0):
        bt += 1
    n_steps = -(-B // bt)
    B_pad = n_steps * bt
    NS, N = bt * S, bt * S * L          # sentences / words handled per step

    # ---- host-side prep ------------------------------------------------------
    gru = gru_repr.astype(compute_dtype)
    if B_pad != B:
        gru = jnp.pad(gru, ((0, B_pad - B), (0, 0), (0, 0)))   # padded rows -> finite junk, sliced off
    gru_flat = gru.reshape(B_pad * S * L, R)                   # lane-dense word-major slab

    ms_t = Ms.T.astype(compute_dtype)                          # (R, A) MXU-native
    ws_row = Ws.astype(jnp.float32)                            # (1, A) scores stay f32

    # Loop-invariant block-diagonal sentence mask for one step, built once on
    # the host instead of re-emitting iota/div/compare every grid iteration.
    sent_of_word = np.arange(N) // L
    mask_np = (np.arange(NS)[:, None] == sent_of_word[None, :]).astype(np.float32)
    mask = jnp.asarray(mask_np).astype(compute_dtype)          # (NS, N)

    # ---- compiler params -----------------------------------------------------
    itemsize = jnp.dtype(compute_dtype).itemsize
    est_vmem = (2 * N * R * itemsize        # gru block, double buffered
                + NS * N * itemsize         # resident mask
                + 4 * NS * N * 4            # f32 (NS, N) softmax intermediates
                + 2 * NS * R * 4            # atte out block, double buffered
                + R * A * itemsize + 2 * A * 4)
    cp_kwargs = {}
    if est_vmem > (12 << 20):
        # raise the scoped VMEM limit (v5e default 16 MiB, v6e/v7x 32 MiB),
        # staying well under v7x's 64 MiB physical VMEM.
        cp_kwargs["vmem_limit_bytes"] = int(min(2 * est_vmem, 48 << 20))
    dim_sem = (pltpu.CORE_PARALLEL if core_parallel else "parallel",)
    compiler_params = pltpu.CompilerParams(dimension_semantics=dim_sem, **cp_kwargs)

    kernel = functools.partial(_snet_kernel, approx_recip=bool(approx_reciprocal))

    atte_flat = pl.pallas_call(
        kernel,
        out_shape=jax.ShapeDtypeStruct((B_pad * S, R), jnp.float32),
        grid_spec=pltpu.PrefetchScalarGridSpec(
            num_scalar_prefetch=0,
            grid=(n_steps,),
            in_specs=[
                pl.BlockSpec((R, A), lambda b: (0, 0)),     # Ms^T  (shared, resident)
                pl.BlockSpec((1, A), lambda b: (0, 0)),     # Ws    (shared, resident)
                pl.BlockSpec((NS, N), lambda b: (0, 0)),    # sentence mask (shared, resident)
                pl.BlockSpec((N, R), lambda b: (b, 0)),     # bt batch rows of gru
            ],
            out_specs=pl.BlockSpec((NS, R), lambda b: (b, 0)),
        ),
        compiler_params=compiler_params,
    )(ms_t, ws_row, mask, gru_flat)

    self_atte = atte_flat[: B * S].reshape(B, S, R)

    # Tiny per-row sentiment reduction: one fused XLA einsum (keeps the kernel
    # epilogue lane-dense / store-free for this output).
    wsum = word_soft.astype(jnp.float32).reshape(B, S, L).sum(axis=-1)   # (B, S)
    sentiment = jnp.einsum('bs,bsr->br', wsum, self_atte)                # (B, R)
    return self_atte, sentiment


def snet_reference(Ms, Ws, gru_repr, word_soft, sent_length):
    """Pure-JAX reference mirroring the PyTorch forward."""
    B, W, R = gru_repr.shape
    L = sent_length
    S = W // L
    g = gru_repr.reshape(B * S, L, R).transpose(0, 2, 1)             # (N, R, L)
    h = jnp.tanh(jnp.einsum('ar,nrl->nal', Ms, g))                   # (N, A, L)
    scores = jnp.einsum('oa,nal->nol', Ws, h)                        # (N, 1, L)
    soft = jax.nn.softmax(scores, axis=-1)                           # (N, 1, L)
    self_atte = jnp.einsum('nrl,nol->nro', g, soft)                  # (N, R, 1)
    wsum = word_soft.reshape(B * S, -1).sum(axis=-1, keepdims=True)  # (N, 1)
    sentiment = (wsum * self_atte[..., 0]).reshape(B, S, R).sum(axis=-2)
    return self_atte.reshape(B, S, R), sentiment


if __name__ == "__main__":
    # batch, sent_count, sent_length, repr_size, self_atte_size
    B, S, L, R, A = 2, 4, 8, 32, 16
    key = jax.random.PRNGKey(0)
    k1, k2, k3, k4 = jax.random.split(key, 4)

    Ms = jax.random.normal(k1, (A, R), dtype=jnp.float32)
    Ws = jax.random.normal(k2, (1, A), dtype=jnp.float32)
    gru_repr = jax.random.normal(k3, (B, S * L, R), dtype=jnp.float32)
    word_soft = jax.nn.softmax(
        jax.random.normal(k4, (B, S * L), dtype=jnp.float32), axis=-1)

    # --- f32 compute path, exact reciprocal: tight check vs. reference -------
    atte32, sent32 = snet_forward(Ms, Ws, gru_repr, word_soft, L,
                                  compute_dtype=jnp.float32,
                                  approx_reciprocal=False)
    jax.block_until_ready((atte32, sent32))
    ref_atte, ref_sent = snet_reference(Ms, Ws, gru_repr, word_soft, L)
    np.testing.assert_allclose(np.asarray(atte32), np.asarray(ref_atte),
                               rtol=1e-4, atol=1e-4)
    np.testing.assert_allclose(np.asarray(sent32), np.asarray(ref_sent),
                               rtol=1e-4, atol=1e-4)

    # --- bf16 production path (approx reciprocal) -----------------------------
    # compared against the reference run on bf16-quantised inputs, so only
    # kernel-implementation error (approx recip, bf16 softmax weights,
    # accumulation order) is measured -- not the intentional input quantisation.
    atte16, sent16 = snet_forward(Ms, Ws, gru_repr, word_soft, L,
                                  compute_dtype=jnp.bfloat16)
    jax.block_until_ready((atte16, sent16))
    Ms_q = Ms.astype(jnp.bfloat16).astype(jnp.float32)
    gru_q = gru_repr.astype(jnp.bfloat16).astype(jnp.float32)
    ref_atte_q, ref_sent_q = snet_reference(Ms_q, Ws, gru_q, word_soft, L)
    np.testing.assert_allclose(np.asarray(atte16), np.asarray(ref_atte_q),
                               rtol=2e-2, atol=2e-2)
    np.testing.assert_allclose(np.asarray(sent16), np.asarray(ref_sent_q),
                               rtol=2e-2, atol=2e-2)

    print("KERNEL_OK")
</pallas_src>

<mosaic_0001>
module attributes {stable_mosaic.version = 11 : i64} {
  func.func @_snet_kernel(%arg0: i32, %arg1: memref<32x16xf32, #tpu.memory_space<vmem>>, %arg2: memref<1x16xf32, #tpu.memory_space<vmem>>, %arg3: memref<8x64xf32, #tpu.memory_space<vmem>>, %arg4: memref<64x32xf32, #tpu.memory_space<vmem>>, %arg5: memref<8x32xf32, #tpu.memory_space<vmem>>) attributes {dimension_semantics = [#tpu.dimension_semantics<parallel>], iteration_bounds = array<i64: 1>, scalar_prefetch = 0 : i64, scratch_operands = 0 : i64, tpu.core_type = #tpu.core_type<tc>, window_params = [{pipeline_mode = #tpu.pipeline_mode<synchronous>, transform_indices = @transform_0, window_bounds = array<i64: 32, 16>}, {pipeline_mode = #tpu.pipeline_mode<synchronous>, transform_indices = @transform_1, window_bounds = array<i64: 1, 16>}, {pipeline_mode = #tpu.pipeline_mode<synchronous>, transform_indices = @transform_2, window_bounds = array<i64: 8, 64>}, {transform_indices = @transform_3, window_bounds = array<i64: 64, 32>}, {transform_indices = @transform_4, window_bounds = array<i64: 8, 32>}]} {
    %c0 = arith.constant 0 : index
    %c0_0 = arith.constant 0 : index
    %0 = vector.load %arg4[%c0, %c0_0] : memref<64x32xf32, #tpu.memory_space<vmem>>, vector<64x32xf32>
    %c0_1 = arith.constant 0 : index
    %c0_2 = arith.constant 0 : index
    %1 = vector.load %arg3[%c0_1, %c0_2] : memref<8x64xf32, #tpu.memory_space<vmem>>, vector<8x64xf32>
    %cst = arith.constant 0.000000e+00 : f32
    %2 = vector.broadcast %cst : f32 to vector<8x64xf32>
    %3 = arith.cmpf one, %1, %2 : vector<8x64xf32>
    %c0_3 = arith.constant 0 : index
    %c0_4 = arith.constant 0 : index
    %4 = vector.load %arg1[%c0_3, %c0_4] : memref<32x16xf32, #tpu.memory_space<vmem>>, vector<32x16xf32>
    %cst_5 = arith.constant dense<0.000000e+00> : vector<64x16xf32>
    %5 = tpu.matmul %0, %4, %cst_5 {dimension_numbers = #tpu.dot_dimension_numbers<[1], [0], [0], [1], [0, 0, 1, 1], [], []>} : vector<64x32xf32>, vector<32x16xf32>, vector<64x16xf32> -> vector<64x16xf32>
    %6 = math.tanh %5 : vector<64x16xf32>
    %c0_6 = arith.constant 0 : index
    %c0_7 = arith.constant 0 : index
    %7 = vector.load %arg2[%c0_6, %c0_7] : memref<1x16xf32, #tpu.memory_space<vmem>>, vector<1x16xf32>
    %cst_8 = arith.constant dense<0.000000e+00> : vector<1x64xf32>
    %8 = tpu.matmul %7, %6, %cst_8 {dimension_numbers = #tpu.dot_dimension_numbers<[1], [1], [0], [0], [0, 0, 1, 0], [], []>} : vector<1x16xf32>, vector<64x16xf32>, vector<1x64xf32> -> vector<1x64xf32>
    %9 = vector.shape_cast %8 : vector<1x64xf32> to vector<1x64xf32>
    %10 = vector.broadcast %9 : vector<1x64xf32> to vector<8x64xf32>
    %cst_9 = arith.constant -1.000000e+30 : f32
    %11 = vector.broadcast %cst_9 : f32 to vector<8x64xf32>
    %12 = arith.select %3, %10, %11 : vector<8x64xi1>, vector<8x64xf32>
    %cst_10 = arith.constant dense<0xFF800000> : vector<8xf32>
    %13 = vector.multi_reduction <maximumf>, %12, %cst_10 [1] : vector<8x64xf32> to vector<8xf32>
    %14 = vector.shape_cast %13 : vector<8xf32> to vector<8x1xf32>
    %15 = vector.shape_cast %14 : vector<8x1xf32> to vector<8x1xf32>
    %16 = vector.broadcast %15 : vector<8x1xf32> to vector<8x64xf32>
    %cst_11 = arith.constant -1.000000e+30 : f32
    %17 = vector.broadcast %cst_11 : f32 to vector<8x64xf32>
    %18 = arith.select %3, %16, %17 : vector<8x64xi1>, vector<8x64xf32>
    %cst_12 = arith.constant dense<0xFF800000> : vector<64xf32>
    %19 = vector.multi_reduction <maximumf>, %18, %cst_12 [0] : vector<8x64xf32> to vector<64xf32>
    %20 = vector.shape_cast %19 : vector<64xf32> to vector<1x64xf32>
    %21 = arith.subf %8, %20 : vector<1x64xf32>
    %22 = math.exp %21 : vector<1x64xf32>
    %23 = vector.shape_cast %22 : vector<1x64xf32> to vector<1x64xf32>
    %24 = vector.broadcast %23 : vector<1x64xf32> to vector<8x64xf32>
    %cst_13 = arith.constant 0.000000e+00 : f32
    %25 = vector.broadcast %cst_13 : f32 to vector<8x64xf32>
    %26 = arith.select %3, %24, %25 : vector<8x64xi1>, vector<8x64xf32>
    %cst_14 = arith.constant dense<0.000000e+00> : vector<8xf32>
    %27 = vector.multi_reduction <add>, %26, %cst_14 [1] : vector<8x64xf32> to vector<8xf32>
    %28 = vector.shape_cast %27 : vector<8xf32> to vector<8x1xf32>
    %29 = vector.broadcast %28 : vector<8x1xf32> to vector<8x64xf32>
    %30 = arith.divf %26, %29 : vector<8x64xf32>
    %cst_15 = arith.constant dense<0.000000e+00> : vector<8x32xf32>
    %31 = tpu.matmul %30, %0, %cst_15 {dimension_numbers = #tpu.dot_dimension_numbers<[1], [0], [0], [1], [0, 0, 1, 1], [], []>} : vector<8x64xf32>, vector<64x32xf32>, vector<8x32xf32> -> vector<8x32xf32>
    %c0_16 = arith.constant 0 : index
    %c0_17 = arith.constant 0 : index
    %32 = vector.load %arg5[%c0_16, %c0_17] : memref<8x32xf32, #tpu.memory_space<vmem>>, vector<8x32xf32>
    tpu.vector_store %arg5[%c0_16, %c0_17], %31 {strides = array<i32>} : memref<8x32xf32, #tpu.memory_space<vmem>>, vector<8x32xf32>,
    return
  }
  func.func @transform_0(%arg0: i32) -> (i32, i32) {
    %c0_i32 = arith.constant 0 : i32
    %c0_i32_0 = arith.constant 0 : i32
    %c0_i32_1 = arith.constant 0 : i32
    return %c0_i32, %c0_i32_0 : i32, i32
  }
  func.func @transform_1(%arg0: i32) -> (i32, i32) {
    %c0_i32 = arith.constant 0 : i32
    %c0_i32_0 = arith.constant 0 : i32
    %c0_i32_1 = arith.constant 0 : i32
    return %c0_i32, %c0_i32_0 : i32, i32
  }
  func.func @transform_2(%arg0: i32) -> (i32, i32) {
    %c0_i32 = arith.constant 0 : i32
    %c0_i32_0 = arith.constant 0 : i32
    %c0_i32_1 = arith.constant 0 : i32
    return %c0_i32, %c0_i32_0 : i32, i32
  }
  func.func @transform_3(%arg0: i32) -> (i32, i32) {
    %c0_i32 = arith.constant 0 : i32
    %c0_i32_0 = arith.constant 0 : i32
    return %arg0, %c0_i32 : i32, i32
  }
  func.func @transform_4(%arg0: i32) -> (i32, i32) {
    %c0_i32 = arith.constant 0 : i32
    %c0_i32_0 = arith.constant 0 : i32
    return %arg0, %c0_i32 : i32, i32
  }
}

</mosaic_0001>

<llo_original>
// kernel: tpu_custom_call.1
$region0: #{tpu_custom_call.1}
  #allocation0 [shape = 'u32[]', space=smem, size = 0x4, offset = 0x4, fixed_abs, tag = 'smem constant byte address 0x4 - core index']
  #allocation1 [shape = 'u32[72,128]{1,0:T(1,128)}', space=vmem, size = 0x9000, scoped, tag = 'internal scratch']
  %s0 = inlined_call_operand.vmem [shape: f32[32,16], index: 0, kind: input, shape index: {}]
  %s1 = inlined_call_operand.vmem [shape: f32[1,16], index: 1, kind: input, shape index: {}]
  %s2 = inlined_call_operand.vmem [shape: f32[8,64], index: 2, kind: input, shape index: {}]
  %s3 = inlined_call_operand.vmem [shape: f32[64,32], index: 3, kind: input, shape index: {}]
  %s4 = inlined_call_operand.hbm [shape: f32[8,32], index: 4, kind: output, shape index: {}]
  %s5 = sld [smem:[#allocation0]]
  $region26: #{tpu_custom_call.1} parent=0
    _
  %s7 = ssub.s32 1, %s5
  %s8 = scalar_select 0, %s7, %s5
  $region1: #{tpu_custom_call.1} parent=0
    #allocation2 [shape = 'u8[4096]{0}', space=vmem, size = 0x1000, scoped, tag = 'output window, operand 0, single buffered']
    #allocation3 [shape = 's32[1]{0}', space=sflag, size = 0x4, scoped, tag = 'scoped memory for tpu_custom_call.1']
    %9 = vsyncpa [#allocation3], 0
    // Predicated region
    $region2: #{tpu_custom_call.1} parent=1 // pred_check
      _
    $region3: #{tpu_custom_call.1} parent=1 // pred_check_branch
      %11 = sbr.rel (0) target = $region5
    $region4: #{tpu_custom_call.1} parent=1 // pred_region
      _
    $region5: #{tpu_custom_call.1} parent=1 // pred_fallthru
      _
    // Predicated region
    $region6: #{tpu_custom_call.1} parent=1 // pred_check
      _
    $region7: #{tpu_custom_call.1} parent=1 // pred_check_branch
      %13 = sbr.rel (0) target = $region9
    $region8: #{tpu_custom_call.1} parent=1 // pred_region
      _
    $region9: #{tpu_custom_call.1} parent=1 // pred_fallthru
      _
    // Predicated region
    $region10: #{tpu_custom_call.1} parent=1 // pred_check
      _
    $region11: #{tpu_custom_call.1} parent=1 // pred_check_branch
      %15 = sbr.rel (0) target = $region13
    $region12: #{tpu_custom_call.1} parent=1 // pred_region
      _
    $region13: #{tpu_custom_call.1} parent=1 // pred_fallthru
      _
    // Predicated region
    $region14: #{tpu_custom_call.1} parent=1 // pred_check
      _
    $region15: #{tpu_custom_call.1} parent=1 // pred_check_branch
      %17 = sbr.rel (0) target = $region17
    $region16: #{tpu_custom_call.1} parent=1 // pred_region
      _
    $region17: #{tpu_custom_call.1} parent=1 // pred_fallthru
      _
    %v18 = vld [vmem:[%s3] sm:$0xff]
    %v19 = vld [vmem:[%s3 + $0x8] sm:$0xff]
    %v20 = vld [vmem:[%s3 + $0x10] sm:$0xff]
    %v21 = vld [vmem:[%s3 + $0x18] sm:$0xff]
    %v22 = vld [vmem:[%s3 + $0x20] sm:$0xff]
    %v23 = vld [vmem:[%s3 + $0x28] sm:$0xff]
    %v24 = vld [vmem:[%s3 + $0x30] sm:$0xff]
    %v25 = vld [vmem:[%s3 + $0x38] sm:$0xff]
    %v26 = vld [vmem:[%s2] sm:$0xff]
    %vm27 = vcmp.ne.f32.partialorder %v26, 0.0
    %v28 = vld [vmem:[%s0] sm:$0xff]
    %v29 = vld [vmem:[%s0 + $0x8] sm:$0xff]
    %v30 = vld [vmem:[%s0 + $0x10] sm:$0xff]
    %v31 = vld [vmem:[%s0 + $0x18] sm:$0xff]
    %vm32 = vcmask 261120
    %v34 = vsel %vm32, %v18, 0
    %v37 = vsel %vm32, %v19, 0
    %v40 = vsel %vm32, %v20, 0
    %v43 = vsel %vm32, %v21, 0
    %v46 = vsel %vm32, %v22, 0
    %v49 = vsel %vm32, %v23, 0
    %v52 = vsel %vm32, %v24, 0
    %v55 = vsel %vm32, %v25, 0
    %57 = vmatpush.msra.mxu0 0.0
    %58 = vmatpush.msra.mxu0 0.0
    %59 = vmatpush.msra.mxu0 0.0
    %60 = vmatpush.msra.mxu0 0.0
    %61 = vmatpush.msra.mxu0 0.0
    %62 = vmatpush.msra.mxu0 0.0
    %63 = vmatpush.msra.mxu0 0.0
    %64 = vmatpush.msra.mxu0 0.0
    %65 = vmatpush.msra.mxu0 0.0
    %66 = vmatpush.msra.mxu0 0.0
    %67 = vmatpush.msra.mxu0 0.0
    %68 = vmatpush.msra.mxu0 0.0
    %69 = vmatpush.msra.mxu0 %v31
    %70 = vmatpush.msra.mxu0 %v30
    %71 = vmatpush.msra.mxu0 %v29
    %72 = vmatpush.msra.mxu0 %v28
    %73 = vmatmul.f32.gmra.mxu0 %v34
    %v74 = vpop.f32.mrf.mxu0
    %v75 = vadd.f32 0.0, %v74
    %76 = vmatmul.f32.gmra.mxu0 %v37
    %v77 = vpop.f32.mrf.mxu0
    %v78 = vadd.f32 0.0, %v77
    %79 = vmatmul.f32.gmra.mxu0 %v40
    %v80 = vpop.f32.mrf.mxu0
    %v81 = vadd.f32 0.0, %v80
    %82 = vmatmul.f32.gmra.mxu0 %v43
    %v83 = vpop.f32.mrf.mxu0
    %v84 = vadd.f32 0.0, %v83
    %85 = vmatmul.f32.gmra.mxu0 %v46
    %v86 = vpop.f32.mrf.mxu0
    %v87 = vadd.f32 0.0, %v86
    %88 = vmatmul.f32.gmra.mxu0 %v49
    %v89 = vpop.f32.mrf.mxu0
    %v90 = vadd.f32 0.0, %v89
    %91 = vmatmul.f32.gmra.mxu0 %v52
    %v92 = vpop.f32.mrf.mxu0
    %v93 = vadd.f32 0.0, %v92
    %94 = vmatmul.f32.gmra.mxu0 %v55
    %v95 = vpop.f32.mrf.mxu0
    %v96 = vadd.f32 0.0, %v95
    %97 = vdwg.mxu0
    %v98 = vtanh.pop %v75
    %v99 = vtanh.pop %v78
    %v100 = vtanh.pop %v81
    %v101 = vtanh.pop %v84
    %v102 = vtanh.pop %v87
    %v103 = vtanh.pop %v90
    %v104 = vtanh.pop %v93
    %v105 = vtanh.pop %v96
    %v106 = vld [vmem:[%s1] sm:$0x1]
    %vm107 = vcmask 130048
    %v109 = vsel %vm107, %v106, 0
    %v112 = vsel %vm107, %v98, 0
    %v115 = vsel %vm107, %v99, 0
    %v118 = vsel %vm107, %v100, 0
    %v121 = vsel %vm107, %v101, 0
    %v124 = vsel %vm107, %v102, 0
    %v127 = vsel %vm107, %v103, 0
    %v130 = vsel %vm107, %v104, 0
    %v133 = vsel %vm107, %v105, 0
    %135 = vmatpush.xpose.msra.mxu0 0.0
    %136 = vmatpush.xpose.msra.mxu0 0.0
    %137 = vmatpush.xpose.msra.mxu0 0.0
    %138 = vmatpush.xpose.msra.mxu0 0.0
    %139 = vmatpush.xpose.msra.mxu0 0.0
    %140 = vmatpush.xpose.msra.mxu0 0.0
    %141 = vmatpush.xpose.msra.mxu0 0.0
    %142 = vmatpush.xpose.msra.mxu0 0.0
    %143 = vmatpush.xpose.msra.mxu0 %v133
    %144 = vmatpush.xpose.msra.mxu0 %v130
    %145 = vmatpush.xpose.msra.mxu0 %v127
    %146 = vmatpush.xpose.msra.mxu0 %v124
    %147 = vmatpush.xpose.msra.mxu0 %v121
    %148 = vmatpush.xpose.msra.mxu0 %v118
    %149 = vmatpush.xpose.msra.mxu0 %v115
    %150 = vmatpush.xpose.msra.mxu0 %v112
    %151 = vmatmul.f32.gmra.mxu0 %v109
    %v152 = vpop.f32.mrf.mxu0
    %v153 = vadd.f32 0.0, %v152
    %154 = vdwg.mxu0
    %v155 = vperm.slane %v153, 0
    %v156 = vsel %vm27, %v155, -1e+30
    %vm157 = vcmask 523264
    %v158 = vsel %vm157, %v156, -inf
    %159 = vmax.xlane.f32.xlu0 %v158
    %v160 = vpop.xlane.xlu0 %159
    %v161 = vsel %vm27, %v160, -1e+30
    %v162 = vsel %vm157, %v161, -inf
    %v163 = vrot.slane %v162, 4
    %v164 = vmax.f32 %v162, %v163
    %v165 = vrot.slane %v164, 2
    %v166 = vmax.f32 %v164, %v165
    %v167 = vrot.slane %v166, 1
    %v168 = vmax.f32 %v166, %v167
    %v169 = vsub.f32 %v153, %v168
    %v170 = vmul.f32 %v169, 1.442695
    %v171 = vpow.pop %v170
    %v172 = vperm.slane %v171, 0
    %v173 = vsel %vm27, %v172, 0.0
    %v174 = vsel %vm157, %v173, 0.0
    %175 = vadd.xlane.f32.xlu0 %v174
    %v176 = vpop.xlane.xlu0 %175
    %v177 = vrcp.pop %v176
    %v178 = vmul.f32 %v176, %v177
    %v179 = vsub.f32 1.0, %v178
    %v180 = vmul.f32 %v177, %v179
    %v181 = vadd.f32 %v177, %v180
    %vm182 = vweird.f32 %v176
    %vm183 = vweird.f32 %v177
    %vm184 = vmor %vm182, %vm183
    %v185 = vsel %vm184, %v177, %v181
    %v186 = vand.u32 2147483647, %v176
    %vm187 = vcmp.eq.f32.partialorder %v186, 8.507059e+37
    %v188 = vand.u32 %v176, 2147483648
    %v189 = vor.u32 1.1754944e-38, %v188
    %v190 = vsel %vm187, %v189, %v185
    %v191 = vmul.f32 %v173, %v190
    %v193 = vsel %vm157, %v191, 0
    %195 = vmatpush.msra.mxu0 0.0
    %196 = vmatpush.msra.mxu0 0.0
    %197 = vmatpush.msra.mxu0 0.0
    %198 = vmatpush.msra.mxu0 0.0
    %199 = vmatpush.msra.mxu0 0.0
    %200 = vmatpush.msra.mxu0 0.0
    %201 = vmatpush.msra.mxu0 0.0
    %202 = vmatpush.msra.mxu0 0.0
    %203 = vmatpush.msra.mxu0 %v25
    %204 = vmatpush.msra.mxu0 %v24
    %205 = vmatpush.msra.mxu0 %v23
    %206 = vmatpush.msra.mxu0 %v22
    %207 = vmatpush.msra.mxu0 %v21
    %208 = vmatpush.msra.mxu0 %v20
    %209 = vmatpush.msra.mxu0 %v19
    %210 = vmatpush.msra.mxu0 %v18
    %211 = vmatmul.f32.gmra.mxu0 %v193
    %v212 = vpop.f32.mrf.mxu0
    %v213 = vadd.f32 0.0, %v212
    %214 = vdwg.mxu0
    %215 = vst.msk [vmem:[#allocation2] sm:$0xff] %vm32, %v213
    // Predicated region
    $region18: #{tpu_custom_call.1} parent=1 // pred_check
      _
    $region19: #{tpu_custom_call.1} parent=1 // pred_check_branch
      %217 = sbr.rel (0) target = $region21
    $region20: #{tpu_custom_call.1} parent=1 // pred_region
      %219 = vsyncadd [#allocation3], 0
      %s221 = sshll.u32 [#allocation2], 4
      %s222 = int_to_ptr.vmem [resolvable:$true] %s221
      %s223 = sshll.u32 %s4, 4
      %s224 = int_to_ptr.hbm [resolvable:$true] %s223
      %226 = dma.vmem_to_hbm [thread:$0]  %s222, 128, %s224, [#allocation3]
    $region21: #{tpu_custom_call.1} parent=1 // pred_fallthru
      _
    // Predicated region
    $region22: #{tpu_custom_call.1} parent=1 // pred_check
      _
    $region23: #{tpu_custom_call.1} parent=1 // pred_check_branch
      %228 = sbr.rel (0) target = $region25
    $region24: #{tpu_custom_call.1} parent=1 // pred_region
      %230 = dma.done [#allocation3], 128
    $region25: #{tpu_custom_call.1} parent=1 // pred_fallthru
      _
    %231 = vsyncpa [#allocation3], 1

</llo_original>
